<compile_context>
chip_gen: v5e
topology: v5e:2x2
jax: 0.10.0
libtpu: 0.0.40
codegen_flags: <defaults>
</compile_context>

<pallas_src>
import functools

import jax
import jax.numpy as jnp
from jax.experimental import pallas as pl
from jax.experimental.pallas import tpu as pltpu

ALPHA = 1.0
GAMMA = 2.0  # kernel exploits gamma == 2 (explicit square)

_TARGET_BLOCK_BYTES = 4 << 20   # ~4 MiB of logits per pipelined block
_ROW_CAP = 2048                 # rows per block cap (amortizes ~0.35us/step)
_VMEM_LIMIT_BYTES = 48 << 20    # fits every generation's physical VMEM


def _choose_tiles(n, c, itemsize, block_bytes):
    """Byte-budgeted (tile_n, tile_c) as a function of N, C and dtype."""
    sub = 16 if itemsize <= 2 else 8                      # bf16 needs (16,128) tiles
    n_pad = max(sub, ((n + sub - 1) // sub) * sub)
    rows = (block_bytes // max(1, c * itemsize)) // sub * sub
    if rows >= sub:
        # full-C blocks fit the budget -> single class block per row tile
        tile_n = int(min(_ROW_CAP, rows, n_pad))
        tile_c = int(c)
    else:
        # very large C (LM-vocab scale): tile the class axis, online LSE path
        tile_n = int(min(n_pad, 256))
        tile_c = max(128, (block_bytes // (tile_n * itemsize)) // 128 * 128)
        tile_c = int(min(tile_c, ((c + 127) // 128) * 128))
    return tile_n, tile_c


def _focal_kernel(logits_ref, targets_ref, out_ref, m_ref, s_ref, t_ref, *,
                  n_rows, n_cols, tile_n, tile_c, per_row):
    # logits_ref : (tile_n, tile_c) float  in VMEM
    # targets_ref: (tile_n, 1)      int32  in VMEM
    # out_ref    : (tile_n, 1) f32 per-row focal   (per_row=True)
    #              (1, 8, 128) f32 per-tile partial sum (per_row=False)
    # m/s/t_ref  : (tile_n, 1) f32 scratch: running max / sum(exp) / target logit
    i = pl.program_id(0)
    j = pl.program_id(1)
    last_j = pl.num_programs(1) - 1

    @pl.when(j == 0)
    def _():
        m_ref[...] = jnp.full_like(m_ref, -jnp.inf)
        s_ref[...] = jnp.zeros_like(s_ref)
        t_ref[...] = jnp.zeros_like(t_ref)

    x = logits_ref[...].astype(jnp.float32)                        # (T, Tc)
    tgt = targets_ref[...]                                         # (T, 1)

    col = j * tile_c + jax.lax.broadcasted_iota(jnp.int32, x.shape, 1)
    if n_cols % tile_c != 0:
        # last class tile overhangs C: neutralize padded lanes (static gate)
        x = jnp.where(col < n_cols, x, -jnp.inf)

    # --- online (flash-style) log-sum-exp over the class axis ---
    blk_max = jnp.max(x, axis=-1, keepdims=True)                   # (T, 1)
    m_new = jnp.maximum(m_ref[...], blk_max)
    corr = jnp.exp(m_ref[...] - m_new)
    s_ref[...] = corr * s_ref[...] + jnp.sum(jnp.exp(x - m_new),
                                             axis=-1, keepdims=True)
    m_ref[...] = m_new
    # gather the target-class logit with a fused select (no one-hot temp)
    t_ref[...] = t_ref[...] + jnp.sum(jnp.where(col == tgt, x, 0.0),
                                      axis=-1, keepdims=True)

    @pl.when(j == last_j)
    def _():
        ce = m_ref[...] + jnp.log(s_ref[...]) - t_ref[...]         # (T, 1)
        pt = jnp.clip(jnp.exp(-ce), 1e-7, 1.0 - 1e-7)
        w = 1.0 - pt
        focal = ALPHA * w * w * ce                                 # gamma == 2

        if n_rows % tile_n != 0:
            # only pay the mask when the last row tile is actually padded
            row = i * tile_n + jax.lax.broadcasted_iota(jnp.int32, focal.shape, 0)
            focal = jnp.where(row < n_rows, focal, 0.0)

        if per_row:
            out_ref[...] = focal
        else:
            psum = jnp.sum(focal)                                  # per-tile partial sum
            out_ref[...] = jnp.full(out_ref.shape, psum, dtype=jnp.float32)


def focal_loss(logits, targets, reduction="mean",
               block_bytes=_TARGET_BLOCK_BYTES):
    """logits: (N, C) float32/bf16, targets: (N,) int. Scalar unless reduction='none'."""
    n, c = logits.shape
    itemsize = jnp.dtype(logits.dtype).itemsize
    tile_n, tile_c = _choose_tiles(n, c, itemsize, block_bytes)
    grid = (pl.cdiv(n, tile_n), pl.cdiv(c, tile_c))

    targets2d = targets.astype(jnp.int32).reshape(n, 1)
    per_row = (reduction == "none")

    kernel = functools.partial(_focal_kernel, n_rows=n, n_cols=c,
                               tile_n=tile_n, tile_c=tile_c, per_row=per_row)

    if per_row:
        out_shape = jax.ShapeDtypeStruct((n, 1), jnp.float32)
        out_spec = pl.BlockSpec((tile_n, 1), lambda i, j: (i, 0))
        out_bytes = n * 4
    else:
        # one lane-dense (8,128) partial-sum block per row tile
        out_shape = jax.ShapeDtypeStruct((grid[0], 8, 128), jnp.float32)
        out_spec = pl.BlockSpec((1, 8, 128), lambda i, j: (i, 0, 0))
        out_bytes = grid[0] * 8 * 128 * 4

    bytes_in = logits.size * itemsize + targets2d.size * 4
    result = pl.pallas_call(
        kernel,
        out_shape=out_shape,
        grid=grid,
        in_specs=[
            pl.BlockSpec((tile_n, tile_c), lambda i, j: (i, j)),
            pl.BlockSpec((tile_n, 1), lambda i, j: (i, 0)),
        ],
        out_specs=out_spec,
        scratch_shapes=[
            pltpu.VMEM((tile_n, 1), jnp.float32),   # running max
            pltpu.VMEM((tile_n, 1), jnp.float32),   # running sum(exp)
            pltpu.VMEM((tile_n, 1), jnp.float32),   # target-class logit
        ],
        compiler_params=pltpu.CompilerParams(
            dimension_semantics=("parallel", "arbitrary"),
            vmem_limit_bytes=_VMEM_LIMIT_BYTES,
        ),
        cost_estimate=pl.CostEstimate(
            flops=8 * n * c,
            transcendentals=n * c + 2 * n,
            bytes_accessed=bytes_in + out_bytes,
        ),
    )(logits, targets2d)

    if per_row:
        return result[:, 0]
    total = jnp.sum(result[:, 0, 0])
    if reduction == "mean":
        return total / jnp.float32(n)
    return total  # 'sum'


def _reference_focal_loss(logits, targets, reduction="mean"):
    # pure-JAX reference matching the PyTorch module
    logits = logits.astype(jnp.float32)
    logp = jax.nn.log_softmax(logits, axis=-1)
    ce = -jnp.take_along_axis(logp, targets[:, None].astype(jnp.int32), axis=-1)[:, 0]
    pt = jnp.clip(jnp.exp(-ce), 1e-7, 1.0 - 1e-7)
    focal = ALPHA * (1.0 - pt) ** GAMMA * ce
    if reduction == "mean":
        return jnp.mean(focal)
    elif reduction == "sum":
        return jnp.sum(focal)
    return focal


if __name__ == "__main__":
    key = jax.random.PRNGKey(0)
    k1, k2, k3, k4, k5, k6 = jax.random.split(key, 6)

    # 1) small shape, single C block, 'mean' (fast path)
    N, C = 8, 32
    logits = jax.random.normal(k1, (N, C), dtype=jnp.float32)
    targets = jax.random.randint(k2, (N,), 0, C, dtype=jnp.int32)
    out = focal_loss(logits, targets, reduction="mean")
    jax.block_until_ready(out)
    ref = _reference_focal_loss(logits, targets, reduction="mean")
    assert jnp.allclose(out, ref, atol=1e-4, rtol=1e-4), (out, ref)

    # 2) force the C-tiled online-LSE path + row/column masking, 'sum'
    N2, C2 = 20, 200
    logits2 = jax.random.normal(k3, (N2, C2), dtype=jnp.float32)
    targets2 = jax.random.randint(k4, (N2,), 0, C2, dtype=jnp.int32)
    out2 = focal_loss(logits2, targets2, reduction="sum", block_bytes=8 * 128 * 4)
    jax.block_until_ready(out2)
    ref2 = _reference_focal_loss(logits2, targets2, reduction="sum")
    assert jnp.allclose(out2, ref2, atol=1e-4, rtol=1e-4), (out2, ref2)

    # 3) per-row 'none' output (row masking, default tiling)
    out3 = focal_loss(logits2, targets2, reduction="none")
    jax.block_until_ready(out3)
    ref3 = _reference_focal_loss(logits2, targets2, reduction="none")
    assert jnp.allclose(out3, ref3, atol=1e-4, rtol=1e-4), (out3, ref3)

    # 4) multiple row tiles -> per-tile partial sums, 'mean'
    N4, C4 = 36, 64
    logits4 = jax.random.normal(k5, (N4, C4), dtype=jnp.float32)
    targets4 = jax.random.randint(k6, (N4,), 0, C4, dtype=jnp.int32)
    out4 = focal_loss(logits4, targets4, reduction="mean", block_bytes=8 * 64 * 4)
    jax.block_until_ready(out4)
    ref4 = _reference_focal_loss(logits4, targets4, reduction="mean")
    assert jnp.allclose(out4, ref4, atol=1e-4, rtol=1e-4), (out4, ref4)

    print("KERNEL_OK")
</pallas_src>

<mosaic_0001>
module attributes {stable_mosaic.version = 11 : i64} {
  func.func @_focal_kernel(%arg0: i32, %arg1: i32, %arg2: memref<8x32xf32, #tpu.memory_space<vmem>>, %arg3: memref<8x1xi32, #tpu.memory_space<vmem>>, %arg4: memref<1x8x128xf32, #tpu.memory_space<vmem>>, %arg5: memref<8x1xf32, #tpu.memory_space<vmem>>, %arg6: memref<8x1xf32, #tpu.memory_space<vmem>>, %arg7: memref<8x1xf32, #tpu.memory_space<vmem>>) attributes {dimension_semantics = [#tpu.dimension_semantics<parallel>, #tpu.dimension_semantics<arbitrary>], iteration_bounds = array<i64: 1, 1>, scalar_prefetch = 0 : i64, scratch_operands = 3 : i64, tpu.core_type = #tpu.core_type<tc>, window_params = [{transform_indices = @transform_0, window_bounds = array<i64: 8, 32>}, {transform_indices = @transform_1, window_bounds = array<i64: 8, 1>}, {transform_indices = @transform_2, window_bounds = array<i64: 1, 8, 128>}]} {
    %c0_i32 = arith.constant 0 : i32
    %0 = arith.cmpi eq, %arg1, %c0_i32 : i32
    %1 = arith.extui %0 : i1 to i32
    %c0_i32_0 = arith.constant 0 : i32
    %2 = arith.cmpi ne, %1, %c0_i32_0 : i32
    scf.if %2 {
      %cst_23 = arith.constant 0xFF800000 : f32
      %38 = vector.broadcast %cst_23 : f32 to vector<8x1xf32>
      %c0_24 = arith.constant 0 : index
      %c0_25 = arith.constant 0 : index
      %39 = vector.load %arg5[%c0_24, %c0_25] : memref<8x1xf32, #tpu.memory_space<vmem>>, vector<8x1xf32>
      tpu.vector_store %arg5[%c0_24, %c0_25], %38 {strides = array<i32>} : memref<8x1xf32, #tpu.memory_space<vmem>>, vector<8x1xf32>,
      %cst_26 = arith.constant 0.000000e+00 : f32
      %40 = vector.broadcast %cst_26 : f32 to vector<8x1xf32>
      %c0_27 = arith.constant 0 : index
      %c0_28 = arith.constant 0 : index
      %41 = vector.load %arg6[%c0_27, %c0_28] : memref<8x1xf32, #tpu.memory_space<vmem>>, vector<8x1xf32>
      tpu.vector_store %arg6[%c0_27, %c0_28], %40 {strides = array<i32>} : memref<8x1xf32, #tpu.memory_space<vmem>>, vector<8x1xf32>,
      %cst_29 = arith.constant 0.000000e+00 : f32
      %42 = vector.broadcast %cst_29 : f32 to vector<8x1xf32>
      %c0_30 = arith.constant 0 : index
      %c0_31 = arith.constant 0 : index
      %43 = vector.load %arg7[%c0_30, %c0_31] : memref<8x1xf32, #tpu.memory_space<vmem>>, vector<8x1xf32>
      tpu.vector_store %arg7[%c0_30, %c0_31], %42 {strides = array<i32>} : memref<8x1xf32, #tpu.memory_space<vmem>>, vector<8x1xf32>,
    } else {
    }
    %c0 = arith.constant 0 : index
    %c0_1 = arith.constant 0 : index
    %3 = vector.load %arg2[%c0, %c0_1] : memref<8x32xf32, #tpu.memory_space<vmem>>, vector<8x32xf32>
    %c0_2 = arith.constant 0 : index
    %c0_3 = arith.constant 0 : index
    %4 = vector.load %arg3[%c0_2, %c0_3] : memref<8x1xi32, #tpu.memory_space<vmem>>, vector<8x1xi32>
    %c32_i32 = arith.constant 32 : i32
    %5 = arith.muli %arg1, %c32_i32 : i32
    %6 = tpu.iota {dimensions = array<i32: 1>} : vector<8x32xi32>
    %7 = vector.broadcast %5 : i32 to vector<8x32xi32>
    %8 = arith.addi %7, %6 : vector<8x32xi32>
    %cst = arith.constant dense<0xFF800000> : vector<8xf32>
    %9 = vector.multi_reduction <maximumf>, %3, %cst [1] : vector<8x32xf32> to vector<8xf32>
    %10 = vector.shape_cast %9 : vector<8xf32> to vector<8x1xf32>
    %c0_4 = arith.constant 0 : index
    %c0_5 = arith.constant 0 : index
    %11 = vector.load %arg5[%c0_4, %c0_5] : memref<8x1xf32, #tpu.memory_space<vmem>>, vector<8x1xf32>
    %12 = arith.maximumf %11, %10 : vector<8x1xf32>
    %c0_6 = arith.constant 0 : index
    %c0_7 = arith.constant 0 : index
    %13 = vector.load %arg5[%c0_6, %c0_7] : memref<8x1xf32, #tpu.memory_space<vmem>>, vector<8x1xf32>
    %14 = arith.subf %13, %12 : vector<8x1xf32>
    %15 = math.exp %14 : vector<8x1xf32>
    %c0_8 = arith.constant 0 : index
    %c0_9 = arith.constant 0 : index
    %16 = vector.load %arg6[%c0_8, %c0_9] : memref<8x1xf32, #tpu.memory_space<vmem>>, vector<8x1xf32>
    %17 = arith.mulf %15, %16 : vector<8x1xf32>
    %18 = vector.broadcast %12 : vector<8x1xf32> to vector<8x32xf32>
    %19 = arith.subf %3, %18 : vector<8x32xf32>
    %20 = math.exp %19 : vector<8x32xf32>
    %cst_10 = arith.constant dense<0.000000e+00> : vector<8xf32>
    %21 = vector.multi_reduction <add>, %20, %cst_10 [1] : vector<8x32xf32> to vector<8xf32>
    %22 = vector.shape_cast %21 : vector<8xf32> to vector<8x1xf32>
    %23 = arith.addf %17, %22 : vector<8x1xf32>
    %c0_11 = arith.constant 0 : index
    %c0_12 = arith.constant 0 : index
    %24 = vector.load %arg6[%c0_11, %c0_12] : memref<8x1xf32, #tpu.memory_space<vmem>>, vector<8x1xf32>
    tpu.vector_store %arg6[%c0_11, %c0_12], %23 {strides = array<i32>} : memref<8x1xf32, #tpu.memory_space<vmem>>, vector<8x1xf32>,
    %c0_13 = arith.constant 0 : index
    %c0_14 = arith.constant 0 : index
    %25 = vector.load %arg5[%c0_13, %c0_14] : memref<8x1xf32, #tpu.memory_space<vmem>>, vector<8x1xf32>
    tpu.vector_store %arg5[%c0_13, %c0_14], %12 {strides = array<i32>} : memref<8x1xf32, #tpu.memory_space<vmem>>, vector<8x1xf32>,
    %c0_15 = arith.constant 0 : index
    %c0_16 = arith.constant 0 : index
    %26 = vector.load %arg7[%c0_15, %c0_16] : memref<8x1xf32, #tpu.memory_space<vmem>>, vector<8x1xf32>
    %27 = vector.broadcast %4 : vector<8x1xi32> to vector<8x32xi32>
    %28 = arith.cmpi eq, %8, %27 : vector<8x32xi32>
    %cst_17 = arith.constant 0.000000e+00 : f32
    %29 = vector.broadcast %cst_17 : f32 to vector<8x32xf32>
    %30 = arith.select %28, %3, %29 : vector<8x32xi1>, vector<8x32xf32>
    %cst_18 = arith.constant dense<0.000000e+00> : vector<8xf32>
    %31 = vector.multi_reduction <add>, %30, %cst_18 [1] : vector<8x32xf32> to vector<8xf32>
    %32 = vector.shape_cast %31 : vector<8xf32> to vector<8x1xf32>
    %33 = arith.addf %26, %32 : vector<8x1xf32>
    %c0_19 = arith.constant 0 : index
    %c0_20 = arith.constant 0 : index
    %34 = vector.load %arg7[%c0_19, %c0_20] : memref<8x1xf32, #tpu.memory_space<vmem>>, vector<8x1xf32>
    tpu.vector_store %arg7[%c0_19, %c0_20], %33 {strides = array<i32>} : memref<8x1xf32, #tpu.memory_space<vmem>>, vector<8x1xf32>,
    %c0_i32_21 = arith.constant 0 : i32
    %35 = arith.cmpi eq, %arg1, %c0_i32_21 : i32
    %36 = arith.extui %35 : i1 to i32
    %c0_i32_22 = arith.constant 0 : i32
    %37 = arith.cmpi ne, %36, %c0_i32_22 : i32
    scf.if %37 {
      %c0_23 = arith.constant 0 : index
      %c0_24 = arith.constant 0 : index
      %38 = vector.load %arg5[%c0_23, %c0_24] : memref<8x1xf32, #tpu.memory_space<vmem>>, vector<8x1xf32>
      %c0_25 = arith.constant 0 : index
      %c0_26 = arith.constant 0 : index
      %39 = vector.load %arg6[%c0_25, %c0_26] : memref<8x1xf32, #tpu.memory_space<vmem>>, vector<8x1xf32>
      %40 = math.log %39 : vector<8x1xf32>
      %41 = arith.addf %38, %40 : vector<8x1xf32>
      %c0_27 = arith.constant 0 : index
      %c0_28 = arith.constant 0 : index
      %42 = vector.load %arg7[%c0_27, %c0_28] : memref<8x1xf32, #tpu.memory_space<vmem>>, vector<8x1xf32>
      %43 = arith.subf %41, %42 : vector<8x1xf32>
      %cst_29 = arith.constant 0.000000e+00 : f32
      %44 = vector.broadcast %cst_29 : f32 to vector<8x1xf32>
      %45 = arith.subf %44, %43 : vector<8x1xf32>
      %46 = math.exp %45 : vector<8x1xf32>
      %cst_30 = arith.constant 1.000000e-07 : f32
      %cst_31 = arith.constant 0.99999988 : f32
      %47 = vector.broadcast %cst_30 : f32 to vector<8x1xf32>
      %48 = arith.maximumf %47, %46 : vector<8x1xf32>
      %49 = vector.broadcast %cst_31 : f32 to vector<8x1xf32>
      %50 = arith.minimumf %49, %48 : vector<8x1xf32>
      %cst_32 = arith.constant 1.000000e+00 : f32
      %51 = vector.broadcast %cst_32 : f32 to vector<8x1xf32>
      %52 = arith.subf %51, %50 : vector<8x1xf32>
      %cst_33 = arith.constant 1.000000e+00 : f32
      %53 = vector.broadcast %cst_33 : f32 to vector<8x1xf32>
      %54 = arith.mulf %53, %52 : vector<8x1xf32>
      %55 = arith.mulf %54, %52 : vector<8x1xf32>
      %56 = arith.mulf %55, %43 : vector<8x1xf32>
      %57 = vector.shape_cast %56 : vector<8x1xf32> to vector<1x8x1xf32>
      %cst_34 = arith.constant dense<0.000000e+00> : vector<1xf32>
      %58 = vector.multi_reduction <add>, %57, %cst_34 [1, 2] : vector<1x8x1xf32> to vector<1xf32>
      %59 = vector.shape_cast %58 : vector<1xf32> to vector<1x1x1xf32>
      %60 = vector.extract %59[0, 0, 0] : f32 from vector<1x1x1xf32>
      %61 = vector.broadcast %60 : f32 to vector<1x8x128xf32>
      %c0_35 = arith.constant 0 : index
      %c0_36 = arith.constant 0 : index
      %c0_37 = arith.constant 0 : index
      %62 = vector.load %arg4[%c0_35, %c0_36, %c0_37] : memref<1x8x128xf32, #tpu.memory_space<vmem>>, vector<1x8x128xf32>
      tpu.vector_store %arg4[%c0_35, %c0_36, %c0_37], %61 {strides = array<i32>} : memref<1x8x128xf32, #tpu.memory_space<vmem>>, vector<1x8x128xf32>,
    } else {
    }
    return
  }
  func.func @transform_0(%arg0: i32, %arg1: i32) -> (i32, i32) {
    %c0_i32 = arith.constant 0 : i32
    return %arg0, %arg1 : i32, i32
  }
  func.func @transform_1(%arg0: i32, %arg1: i32) -> (i32, i32) {
    %c0_i32 = arith.constant 0 : i32
    %c0_i32_0 = arith.constant 0 : i32
    return %arg0, %c0_i32 : i32, i32
  }
  func.func @transform_2(%arg0: i32, %arg1: i32) -> (i32, i32, i32) {
    %c0_i32 = arith.constant 0 : i32
    %c0_i32_0 = arith.constant 0 : i32
    %c0_i32_1 = arith.constant 0 : i32
    return %arg0, %c0_i32, %c0_i32_0 : i32, i32, i32
  }
}

</mosaic_0001>

<llo_original>
// kernel: tpu_custom_call.1
$region0: #{tpu_custom_call.1}
  #allocation0 [shape = 'u32[]', space=smem, size = 0x4, offset = 0x4, fixed_abs, tag = 'smem constant byte address 0x4 - core index']
  #allocation1 [shape = 'u32[72,128]{1,0:T(1,128)}', space=vmem, size = 0x9000, scoped, tag = 'internal scratch']
  #allocation2 [shape = 'f32[8,1]{1,0:T(8,128)}', space=vmem, size = 0x1000, scoped, tag = 'scratch operand']
  #allocation3 [shape = 'f32[8,1]{1,0:T(8,128)}', space=vmem, size = 0x1000, scoped, tag = 'scratch operand']
  #allocation4 [shape = 'f32[8,1]{1,0:T(8,128)}', space=vmem, size = 0x1000, scoped, tag = 'scratch operand']
  %s0 = inlined_call_operand.vmem [shape: f32[8,32], index: 0, kind: input, shape index: {}]
  %s1 = inlined_call_operand.vmem [shape: s32[8,1], index: 1, kind: input, shape index: {}]
  %s2 = inlined_call_operand.hbm [shape: f32[1,8,128], index: 2, kind: output, shape index: {}]
  %s3 = sld [smem:[#allocation0]]
  $region26: #{tpu_custom_call.1} parent=0
    _
  %s5 = ssub.s32 1, %s3
  %s6 = scalar_select 0, %s5, %s3
  $region1: #{tpu_custom_call.1} parent=0
    #allocation5 [shape = 'u8[4096]{0}', space=vmem, size = 0x1000, scoped, tag = 'output window, operand 0, single buffered']
    #allocation6 [shape = 's32[1]{0}', space=sflag, size = 0x4, scoped, tag = 'scoped memory for tpu_custom_call.1']
    %7 = vsyncpa [#allocation6], 0
    // Predicated region
    $region2: #{tpu_custom_call.1} parent=1 // pred_check
      _
    $region3: #{tpu_custom_call.1} parent=1 // pred_check_branch
      %9 = sbr.rel (0) target = $region5
    $region4: #{tpu_custom_call.1} parent=1 // pred_region
      _
    $region5: #{tpu_custom_call.1} parent=1 // pred_fallthru
      _
    // Predicated region
    $region6: #{tpu_custom_call.1} parent=1 // pred_check
      _
    $region7: #{tpu_custom_call.1} parent=1 // pred_check_branch
      %11 = sbr.rel (0) target = $region9
    $region8: #{tpu_custom_call.1} parent=1 // pred_region
      _
    $region9: #{tpu_custom_call.1} parent=1 // pred_fallthru
      _
    %p12 = scmp.eq.s32.totalorder 0, 0
    // Predicated region
    $region10: #{tpu_custom_call.1} parent=1 // pred_check
      %p13 = pneg %p12
    $region11: #{tpu_custom_call.1} parent=1 // pred_check_branch
      %15 = sbr.rel (%p13) target = $region13
    $region12: #{tpu_custom_call.1} parent=1 // pred_region
      %vm16 = vcmask 7168
      %17 = vst.msk [vmem:[#allocation2] sm:$0xff] %vm16, -inf
      %18 = vst.msk [vmem:[#allocation3] sm:$0xff] %vm16, 0.0
      %19 = vst.msk [vmem:[#allocation4] sm:$0xff] %vm16, 0.0
    $region13: #{tpu_custom_call.1} parent=1 // pred_fallthru
      _
    %v20 = vld [vmem:[%s0] sm:$0xff]
    %v21 = vld [vmem:[%s1] sm:$0xff]
    %s22 = smul.u32 0, 32
    %v23 = vlaneseq
    %v24 = vand.u32 %v23, 127
    %v25 = vstv %s22
    %v26 = vadd.s32 %v25, %v24
    %vm27 = vcmask 261120
    %v28 = vsel %vm27, %v20, -inf
    %29 = vmax.xlane.f32.xlu0 %v28
    %v30 = vpop.xlane.xlu0 %29
    %v31 = vld [vmem:[#allocation2] sm:$0xff]
    %v32 = vmax.f32 %v31, %v30
    %v33 = vsub.f32 %v31, %v32
    %v34 = vmul.f32 %v33, 1.442695
    %v35 = vpow.pop %v34
    %v36 = vld [vmem:[#allocation3] sm:$0xff]
    %v37 = vmul.f32 %v35, %v36
    %39 = vset.pattern.permute.xlu0 0
    %40 = vperm.xlu0 %39, %v32
    %v41 = vpop.permute.xlu0 %40
    %v43 = vsub.f32 %v20, %v41
    %v44 = vmul.f32 %v43, 1.442695
    %v45 = vpow.pop %v44
    %v46 = vsel %vm27, %v45, 0.0
    %47 = vadd.xlane.f32.xlu0 %v46
    %v48 = vpop.xlane.xlu0 %47
    %v49 = vadd.f32 %v37, %v48
    %vm50 = vcmask 7168
    %51 = vst.msk [vmem:[#allocation3] sm:$0xff] %vm50, %v49
    %52 = vst.msk [vmem:[#allocation2] sm:$0xff] %vm50, %v32
    %v53 = vld [vmem:[#allocation4] sm:$0xff]
    %54 = vset.pattern.permute.xlu0 0
    %55 = vperm.xlu0 %54, %v21
    %v56 = vpop.permute.xlu0 %55
    %vm57 = vcmp.eq.s32.totalorder %v26, %v56
    %v58 = vsel %vm57, %v20, 0.0
    %v59 = vsel %vm27, %v58, 0.0
    %60 = vadd.xlane.f32.xlu0 %v59
    %v61 = vpop.xlane.xlu0 %60
    %v62 = vadd.f32 %v53, %v61
    %63 = vst.msk [vmem:[#allocation4] sm:$0xff] %vm50, %v62
    // Predicated region
    $region14: #{tpu_custom_call.1} parent=1 // pred_check
      %p64 = pneg %p12
    $region15: #{tpu_custom_call.1} parent=1 // pred_check_branch
      %66 = sbr.rel (%p64) target = $region17
    $region16: #{tpu_custom_call.1} parent=1 // pred_region
      %v67 = vld [vmem:[#allocation2] sm:$0xff]
      %v68 = vld [vmem:[#allocation3] sm:$0xff]
      %v69 = vlog2.pop %v68
      %v70 = vmul.f32 %v69, 0.6931472
      %v71 = vadd.f32 %v67, %v70
      %v72 = vld [vmem:[#allocation4] sm:$0xff]
      %v73 = vsub.f32 %v71, %v72
      %v74 = vsub.f32 0.0, %v73
      %v75 = vmul.f32 %v74, 1.442695
      %v76 = vpow.pop %v75
      %v77 = vmax.f32 %v76, 1e-07
      %v78 = vmin.f32 %v77, 0.9999999
      %v79 = vsub.f32 1.0, %v78
      %v80 = vmul.f32 %v79, %v79
      %v81 = vmul.f32 %v80, %v73
      %v82 = vsel %vm50, %v81, 0.0
      %83 = vadd.xlane.f32.xlu0 %v82
      %v84 = vpop.xlane.xlu0 %83
      %v85 = vrot.slane %v84, 4
      %v86 = vadd.f32 %v84, %v85
      %v87 = vrot.slane %v86, 2
      %v88 = vadd.f32 %v86, %v87
      %v89 = vrot.slane %v88, 1
      %v90 = vadd.f32 %v88, %v89
      %s91 = vtos %v90
      %v92 = vstv %s91
      %93 = vst [vmem:[#allocation5] sm:$0xff] %v92
    $region17: #{tpu_custom_call.1} parent=1 // pred_fallthru
      _
    // Predicated region
    $region18: #{tpu_custom_call.1} parent=1 // pred_check
      _
    $region19: #{tpu_custom_call.1} parent=1 // pred_check_branch
      %95 = sbr.rel (0) target = $region21
    $region20: #{tpu_custom_call.1} parent=1 // pred_region
      %97 = vsyncadd [#allocation6], 0
      %s99 = sshll.u32 [#allocation5], 4
      %s100 = int_to_ptr.vmem [resolvable:$true] %s99
      %s101 = sshll.u32 %s2, 4
      %s102 = int_to_ptr.hbm [resolvable:$true] %s101
      %104 = dma.vmem_to_hbm [thread:$0]  %s100, 128, %s102, [#allocation6]
    $region21: #{tpu_custom_call.1} parent=1 // pred_fallthru
      _
    // Predicated region
    $region22: #{tpu_custom_call.1} parent=1 // pred_check
      _
    $region23: #{tpu_custom_call.1} parent=1 // pred_check_branch
      %106 = sbr.rel (0) target = $region25
    $region24: #{tpu_custom_call.1} parent=1 // pred_region
      %108 = dma.done [#allocation6], 128
    $region25: #{tpu_custom_call.1} parent=1 // pred_fallthru
      _
    %109 = vsyncpa [#allocation6], 1

</llo_original>
